<compile_context>
chip_gen: v7x
topology: tpu7x:2x2x1
jax: 0.10.0
libtpu: 0.0.40
codegen_flags: <defaults>
</compile_context>

<pallas_src>
import functools

import jax
import jax.numpy as jnp
from jax import lax
from jax.experimental import pallas as pl
from jax.experimental.pallas import tpu as pltpu

LANES = 128
MAX_TILE_ROWS = 1024   # (1024,128) f32 tile: 2 inputs x 2 pipeline bufs = 2 MiB VMEM
NUM_CORES = 2          # v7x megacore sharding; harmless on v5e/v6e (1 TC)


def _cdiv(a, b):
    return -(-a // b)


def _round_up(a, b):
    return _cdiv(a, b) * b


def _dice_partial_kernel(pr_ref, gt_ref, out_ref, *, tile_rows, tiles_per_core,
                         n_valid):
    c = pl.program_id(0)   # core / partial-sum slot (parallel axis)
    i = pl.program_id(1)   # row-tile index within this core's range (reduction)

    # First visit of this core's resident output block: zero the accumulators.
    @pl.when(i == 0)
    def _():
        out_ref[...] = jnp.zeros_like(out_ref)

    # Validity mask for tail / out-of-range rows of this tile.  `base` is the
    # global flat index of tile element (0, 0); anything >= n_valid is padding
    # (or a clamped duplicate block) and must not contribute.
    tile_elems = tile_rows * LANES
    base = (c * tiles_per_core + i) * tile_elems
    row = lax.broadcasted_iota(jnp.int32, (tile_rows, LANES), 0)
    col = lax.broadcasted_iota(jnp.int32, (tile_rows, LANES), 1)
    valid = (row * LANES + col) < (n_valid - base)

    pr = pr_ref[...].astype(jnp.float32)
    gt = gt_ref[...].astype(jnp.float32)

    p = 1.0 / (1.0 + jnp.exp(-pr))          # sigmoid (exp on EUP slot)
    p = jnp.where(valid, p, 0.0)
    g = jnp.where(valid, gt, 0.0)

    # Fold (tile_rows, 128) -> (8, 128): vreg-aligned reshape, pure VPU adds
    # (no per-step XLU cross-lane reduction, no per-step scalar RMW chain).
    fold = (tile_rows // 8, 8, LANES)
    prod_fold = jnp.sum((g * p).reshape(fold), axis=0)
    p_fold = jnp.sum(p.reshape(fold), axis=0)
    g_fold = jnp.sum(g.reshape(fold), axis=0)

    out_ref[0, 0, :, :] += prod_fold   # partial sum(gt * p)
    out_ref[0, 1, :, :] += p_fold      # partial sum(p)
    out_ref[0, 2, :, :] += g_fold      # partial sum(gt)


def dice_loss(y_pr, y_gt, *, eps=1e-7, beta=1.0):
    """Pallas TPU DiceLoss forward; y_pr/y_gt are same-shape tensors (e.g. NCHW)."""
    assert y_pr.shape == y_gt.shape
    n_elem = 1
    for d in y_pr.shape:
        n_elem *= int(d)

    # Keep native dtypes; cast to f32 inside the kernel.
    pr_flat = y_pr.reshape(-1)
    gt_flat = y_gt.reshape(-1)

    rows = _cdiv(n_elem, LANES)
    padded = rows * LANES
    if padded != n_elem:
        # Minimal pad only so the flat view reshapes to lane-dense 2D; the pad
        # region is masked out inside the kernel, so its value is irrelevant.
        pad = padded - n_elem
        pr_flat = jnp.pad(pr_flat, (0, pad))
        gt_flat = jnp.pad(gt_flat, (0, pad))

    pr2d = pr_flat.reshape(rows, LANES)
    gt2d = gt_flat.reshape(rows, LANES)

    tile_rows = min(MAX_TILE_ROWS, _round_up(rows, 8))
    n_tiles = _cdiv(rows, tile_rows)
    tiles_per_core = _cdiv(n_tiles, NUM_CORES)

    kernel = functools.partial(
        _dice_partial_kernel,
        tile_rows=tile_rows,
        tiles_per_core=tiles_per_core,
        n_valid=n_elem,
    )

    # Clamp the block index so a core whose range runs past the last real tile
    # DMAs a valid block; its contribution is zeroed by the in-kernel mask.
    def in_map(c, i):
        return (jnp.minimum(c * tiles_per_core + i, n_tiles - 1), 0)

    partials = pl.pallas_call(
        kernel,
        out_shape=jax.ShapeDtypeStruct((NUM_CORES, 3, 8, LANES), jnp.float32),
        grid_spec=pltpu.PrefetchScalarGridSpec(
            num_scalar_prefetch=0,
            grid=(NUM_CORES, tiles_per_core),
            in_specs=[
                pl.BlockSpec((tile_rows, LANES), in_map),
                pl.BlockSpec((tile_rows, LANES), in_map),
            ],
            out_specs=pl.BlockSpec((1, 3, 8, LANES), lambda c, i: (c, 0, 0, 0)),
        ),
        compiler_params=pltpu.CompilerParams(
            dimension_semantics=("parallel", "arbitrary"),
        ),
    )(pr2d, gt2d)

    # Final (tiny) cross-lane combine + dice score in the wrapper.
    sums = jnp.sum(partials, axis=(0, 2, 3))            # (3,): tp, sum(p), sum(gt)
    tp = sums[0]
    fp = sums[1] - tp
    fn = sums[2] - tp
    b2 = float(beta) ** 2
    score = ((1.0 + b2) * tp + eps) / ((1.0 + b2) * tp + b2 * fn + fp + eps)
    return 1.0 - score
    # TODO(synk): 'softmax2d' activation and threshold binarization branches of
    # f_score are unused by DiceLoss.forward and are not implemented here.


def _dice_loss_ref(y_pr, y_gt, eps=1e-7, beta=1.0):
    p = jax.nn.sigmoid(y_pr.astype(jnp.float32))
    gt = y_gt.astype(jnp.float32)
    tp = jnp.sum(gt * p)
    fp = jnp.sum(p) - tp
    fn = jnp.sum(gt) - tp
    b2 = beta * beta
    score = ((1 + b2) * tp + eps) / ((1 + b2) * tp + b2 * fn + fp + eps)
    return 1.0 - score


if __name__ == "__main__":
    key = jax.random.PRNGKey(0)
    k1, k2 = jax.random.split(key)
    # NCHW, like the PyTorch module's typical segmentation inputs
    y_pr = jax.random.normal(k1, (2, 4, 16, 16), dtype=jnp.float32)
    y_gt = (jax.random.uniform(k2, (2, 4, 16, 16)) > 0.5).astype(jnp.float32)

    loss = dice_loss(y_pr, y_gt)
    jax.block_until_ready(loss)

    ref = _dice_loss_ref(y_pr, y_gt)
    assert jnp.allclose(loss, ref, rtol=1e-5, atol=1e-6), (loss, ref)
    print("KERNEL_OK")
</pallas_src>

<mosaic_0001>
module attributes {stable_mosaic.version = 11 : i64} {
  func.func @_dice_partial_kernel(%arg0: i32, %arg1: i32, %arg2: memref<16x128xf32, #tpu.memory_space<vmem>>, %arg3: memref<16x128xf32, #tpu.memory_space<vmem>>, %arg4: memref<1x3x8x128xf32, #tpu.memory_space<vmem>>) attributes {dimension_semantics = [#tpu.dimension_semantics<parallel>, #tpu.dimension_semantics<arbitrary>], iteration_bounds = array<i64: 2, 1>, scalar_prefetch = 0 : i64, scratch_operands = 0 : i64, tpu.core_type = #tpu.core_type<tc>, window_params = [{transform_indices = @transform_0, window_bounds = array<i64: 16, 128>}, {transform_indices = @transform_1, window_bounds = array<i64: 16, 128>}, {transform_indices = @transform_2, window_bounds = array<i64: 1, 3, 8, 128>}]} {
    %c0_i32 = arith.constant 0 : i32
    %0 = arith.cmpi eq, %arg1, %c0_i32 : i32
    %1 = arith.extui %0 : i1 to i32
    %c0_i32_0 = arith.constant 0 : i32
    %2 = arith.cmpi ne, %1, %c0_i32_0 : i32
    scf.if %2 {
      %cst_34 = arith.constant 0.000000e+00 : f32
      %52 = vector.broadcast %cst_34 : f32 to vector<1x3x8x128xf32>
      %c0_35 = arith.constant 0 : index
      %c0_36 = arith.constant 0 : index
      %c0_37 = arith.constant 0 : index
      %c0_38 = arith.constant 0 : index
      %53 = vector.load %arg4[%c0_35, %c0_36, %c0_37, %c0_38] : memref<1x3x8x128xf32, #tpu.memory_space<vmem>>, vector<1x3x8x128xf32>
      tpu.vector_store %arg4[%c0_35, %c0_36, %c0_37, %c0_38], %52 {strides = array<i32>} : memref<1x3x8x128xf32, #tpu.memory_space<vmem>>, vector<1x3x8x128xf32>,
    } else {
    }
    %c1_i32 = arith.constant 1 : i32
    %3 = arith.muli %arg0, %c1_i32 : i32
    %4 = arith.addi %3, %arg1 : i32
    %c2048_i32 = arith.constant 2048 : i32
    %5 = arith.muli %4, %c2048_i32 : i32
    %6 = tpu.iota {dimensions = array<i32: 0>} : vector<16x128xi32>
    %7 = tpu.iota {dimensions = array<i32: 1>} : vector<16x128xi32>
    %c128_i32 = arith.constant 128 : i32
    %8 = vector.broadcast %c128_i32 : i32 to vector<16x128xi32>
    %9 = arith.muli %6, %8 : vector<16x128xi32>
    %10 = arith.addi %9, %7 : vector<16x128xi32>
    %c2048_i32_1 = arith.constant 2048 : i32
    %11 = arith.subi %c2048_i32_1, %5 : i32
    %12 = vector.broadcast %11 : i32 to vector<16x128xi32>
    %13 = arith.cmpi slt, %10, %12 : vector<16x128xi32>
    %c0 = arith.constant 0 : index
    %c0_2 = arith.constant 0 : index
    %14 = vector.load %arg2[%c0, %c0_2] : memref<16x128xf32, #tpu.memory_space<vmem>>, vector<16x128xf32>
    %c0_3 = arith.constant 0 : index
    %c0_4 = arith.constant 0 : index
    %15 = vector.load %arg3[%c0_3, %c0_4] : memref<16x128xf32, #tpu.memory_space<vmem>>, vector<16x128xf32>
    %cst = arith.constant 0.000000e+00 : f32
    %16 = vector.broadcast %cst : f32 to vector<16x128xf32>
    %17 = arith.subf %16, %14 : vector<16x128xf32>
    %18 = math.exp %17 : vector<16x128xf32>
    %cst_5 = arith.constant 1.000000e+00 : f32
    %19 = vector.broadcast %cst_5 : f32 to vector<16x128xf32>
    %20 = arith.addf %19, %18 : vector<16x128xf32>
    %cst_6 = arith.constant 1.000000e+00 : f32
    %21 = vector.broadcast %cst_6 : f32 to vector<16x128xf32>
    %22 = arith.divf %21, %20 : vector<16x128xf32>
    %cst_7 = arith.constant 0.000000e+00 : f32
    %23 = vector.broadcast %cst_7 : f32 to vector<16x128xf32>
    %24 = arith.select %13, %22, %23 : vector<16x128xi1>, vector<16x128xf32>
    %cst_8 = arith.constant 0.000000e+00 : f32
    %25 = vector.broadcast %cst_8 : f32 to vector<16x128xf32>
    %26 = arith.select %13, %15, %25 : vector<16x128xi1>, vector<16x128xf32>
    %27 = arith.mulf %26, %24 : vector<16x128xf32>
    %28 = vector.shape_cast %27 : vector<16x128xf32> to vector<2x8x128xf32>
    %cst_9 = arith.constant dense<0.000000e+00> : vector<8x128xf32>
    %29 = vector.multi_reduction <add>, %28, %cst_9 [0] : vector<2x8x128xf32> to vector<8x128xf32>
    %30 = vector.shape_cast %24 : vector<16x128xf32> to vector<2x8x128xf32>
    %cst_10 = arith.constant dense<0.000000e+00> : vector<8x128xf32>
    %31 = vector.multi_reduction <add>, %30, %cst_10 [0] : vector<2x8x128xf32> to vector<8x128xf32>
    %32 = vector.shape_cast %26 : vector<16x128xf32> to vector<2x8x128xf32>
    %cst_11 = arith.constant dense<0.000000e+00> : vector<8x128xf32>
    %33 = vector.multi_reduction <add>, %32, %cst_11 [0] : vector<2x8x128xf32> to vector<8x128xf32>
    %c0_12 = arith.constant 0 : index
    %c0_13 = arith.constant 0 : index
    %c0_14 = arith.constant 0 : index
    %c0_15 = arith.constant 0 : index
    %34 = vector.load %arg4[%c0_12, %c0_13, %c0_14, %c0_15] : memref<1x3x8x128xf32, #tpu.memory_space<vmem>>, vector<1x1x8x128xf32>
    %35 = vector.shape_cast %34 : vector<1x1x8x128xf32> to vector<8x128xf32>
    %36 = arith.addf %35, %29 : vector<8x128xf32>
    %c0_16 = arith.constant 0 : index
    %c0_17 = arith.constant 0 : index
    %c0_18 = arith.constant 0 : index
    %c0_19 = arith.constant 0 : index
    %37 = vector.load %arg4[%c0_16, %c0_17, %c0_18, %c0_19] : memref<1x3x8x128xf32, #tpu.memory_space<vmem>>, vector<1x1x8x128xf32>
    %38 = vector.shape_cast %37 : vector<1x1x8x128xf32> to vector<8x128xf32>
    %39 = vector.shape_cast %36 : vector<8x128xf32> to vector<1x1x8x128xf32>
    tpu.vector_store %arg4[%c0_16, %c0_17, %c0_18, %c0_19], %39 {strides = array<i32>} : memref<1x3x8x128xf32, #tpu.memory_space<vmem>>, vector<1x1x8x128xf32>,
    %c0_20 = arith.constant 0 : index
    %c1 = arith.constant 1 : index
    %c0_21 = arith.constant 0 : index
    %c0_22 = arith.constant 0 : index
    %40 = vector.load %arg4[%c0_20, %c1, %c0_21, %c0_22] : memref<1x3x8x128xf32, #tpu.memory_space<vmem>>, vector<1x1x8x128xf32>
    %41 = vector.shape_cast %40 : vector<1x1x8x128xf32> to vector<8x128xf32>
    %42 = arith.addf %41, %31 : vector<8x128xf32>
    %c0_23 = arith.constant 0 : index
    %c1_24 = arith.constant 1 : index
    %c0_25 = arith.constant 0 : index
    %c0_26 = arith.constant 0 : index
    %43 = vector.load %arg4[%c0_23, %c1_24, %c0_25, %c0_26] : memref<1x3x8x128xf32, #tpu.memory_space<vmem>>, vector<1x1x8x128xf32>
    %44 = vector.shape_cast %43 : vector<1x1x8x128xf32> to vector<8x128xf32>
    %45 = vector.shape_cast %42 : vector<8x128xf32> to vector<1x1x8x128xf32>
    tpu.vector_store %arg4[%c0_23, %c1_24, %c0_25, %c0_26], %45 {strides = array<i32>} : memref<1x3x8x128xf32, #tpu.memory_space<vmem>>, vector<1x1x8x128xf32>,
    %c0_27 = arith.constant 0 : index
    %c2 = arith.constant 2 : index
    %c0_28 = arith.constant 0 : index
    %c0_29 = arith.constant 0 : index
    %46 = vector.load %arg4[%c0_27, %c2, %c0_28, %c0_29] : memref<1x3x8x128xf32, #tpu.memory_space<vmem>>, vector<1x1x8x128xf32>
    %47 = vector.shape_cast %46 : vector<1x1x8x128xf32> to vector<8x128xf32>
    %48 = arith.addf %47, %33 : vector<8x128xf32>
    %c0_30 = arith.constant 0 : index
    %c2_31 = arith.constant 2 : index
    %c0_32 = arith.constant 0 : index
    %c0_33 = arith.constant 0 : index
    %49 = vector.load %arg4[%c0_30, %c2_31, %c0_32, %c0_33] : memref<1x3x8x128xf32, #tpu.memory_space<vmem>>, vector<1x1x8x128xf32>
    %50 = vector.shape_cast %49 : vector<1x1x8x128xf32> to vector<8x128xf32>
    %51 = vector.shape_cast %48 : vector<8x128xf32> to vector<1x1x8x128xf32>
    tpu.vector_store %arg4[%c0_30, %c2_31, %c0_32, %c0_33], %51 {strides = array<i32>} : memref<1x3x8x128xf32, #tpu.memory_space<vmem>>, vector<1x1x8x128xf32>,
    return
  }
  func.func @transform_0(%arg0: i32, %arg1: i32) -> (i32, i32) {
    %c1_i32 = arith.constant 1 : i32
    %0 = arith.muli %arg0, %c1_i32 : i32
    %1 = arith.addi %0, %arg1 : i32
    %c0_i32 = arith.constant 0 : i32
    %2 = arith.minsi %1, %c0_i32 : i32
    %c0_i32_0 = arith.constant 0 : i32
    %c0_i32_1 = arith.constant 0 : i32
    return %2, %c0_i32_0 : i32, i32
  }
  func.func @transform_1(%arg0: i32, %arg1: i32) -> (i32, i32) {
    %c1_i32 = arith.constant 1 : i32
    %0 = arith.muli %arg0, %c1_i32 : i32
    %1 = arith.addi %0, %arg1 : i32
    %c0_i32 = arith.constant 0 : i32
    %2 = arith.minsi %1, %c0_i32 : i32
    %c0_i32_0 = arith.constant 0 : i32
    %c0_i32_1 = arith.constant 0 : i32
    return %2, %c0_i32_0 : i32, i32
  }
  func.func @transform_2(%arg0: i32, %arg1: i32) -> (i32, i32, i32, i32) {
    %c0_i32 = arith.constant 0 : i32
    %c0_i32_0 = arith.constant 0 : i32
    %c0_i32_1 = arith.constant 0 : i32
    %c0_i32_2 = arith.constant 0 : i32
    return %arg0, %c0_i32, %c0_i32_0, %c0_i32_1 : i32, i32, i32, i32
  }
}

</mosaic_0001>

<llo_original>
// kernel: tpu_custom_call.1
$region0: #{tpu_custom_call.1}
  #allocation0 [shape = 'u32[]', space=smem, size = 0x4, offset = 0x4, fixed_abs, tag = 'smem constant byte address 0x4 - core index']
  #allocation1 [shape = 'u32[144,128]{1,0:T(1,128)}', space=vmem, size = 0x12000, scoped, tag = 'internal scratch']
  %s0 = inlined_call_operand.hbm [shape: f32[16,128], index: 0, kind: input, shape index: {}]
  %s1 = inlined_call_operand.hbm [shape: f32[16,128], index: 1, kind: input, shape index: {}]
  %s2 = inlined_call_operand.hbm [shape: f32[2,3,8,128], index: 2, kind: output, shape index: {}]
  %s3 = sld [smem:[#allocation0]]
  $region53: #{tpu_custom_call.1} parent=0
    _
  %s5 = ssub.s32 1, %s3
  %s6 = scalar_select 0, %s5, %s3
  $region1: #{tpu_custom_call.1} parent=0
    #allocation2 [shape = 'u8[16384]{0}', space=vmem, size = 0x4000, scoped, tag = 'input window, operand 0']
    #allocation3 [shape = 's32[2]{0}', space=sflag, size = 0x8, scoped, tag = 'scoped memory for tpu_custom_call.1']
    #allocation4 [shape = 's32[2]{0}', space=sflag, size = 0x8, scoped, tag = 'scoped memory for tpu_custom_call.1']
    #allocation5 [shape = 'u8[16384]{0}', space=vmem, size = 0x4000, scoped, tag = 'input window, operand 1']
    #allocation6 [shape = 's32[2]{0}', space=sflag, size = 0x8, scoped, tag = 'scoped memory for tpu_custom_call.1']
    #allocation7 [shape = 'u8[24576]{0}', space=vmem, size = 0x6000, scoped, tag = 'output window, operand 0']
    %7 = vsyncpa [#allocation3], 0
    %s8 = scalar_lea.sflag [#allocation3], 1
    %9 = vsyncpa %s8, 0
    %10 = vsyncpa [#allocation6], 0
    %s11 = scalar_lea.sflag [#allocation6], 1
    %12 = vsyncpa %s11, 0
    %13 = vsyncpa [#allocation4], 0
    %s14 = scalar_lea.sflag [#allocation4], 1
    %15 = vsyncpa %s14, 0
    loop: start=0, step=1, limit=4
    $region2: #{tpu_custom_call.1} parent=1 // loop_pre_header
      _
    $region3: #{tpu_custom_call.1} parent=1 // loop_header
      %s17 = sphi 0, %s21
      %p18 = scmp.ge.s32.totalorder %s17, 4
      %s24 = sphi 0, %s36
      %s25 = sphi 0, %s32
      %s26 = sphi 0, %s24
      %s27 = sphi 0, %s25
      %s28 = sphi 0, %s26
      %s29 = sphi 0, %s27
      %s45 = sphi 0, %s47
      %s48 = sphi 0, %s45
      %s49 = sphi 0, %s48
      %s65 = sphi 0, %s49
      %s77 = sphi 0, %s79
      %s80 = sphi 0, %s77
      %s81 = sphi 0, %s80
      %s97 = sphi 0, %s81
      %s103 = sphi 0, %s105
      %s106 = sphi 0, %s103
      %s107 = sphi 0, %s106
      %s123 = sphi 0, %s107
    $region4: #{tpu_custom_call.1} parent=1 // loop_header_branch
      %20 = sbr.rel (%p18) target = $region8
    $region5: #{tpu_custom_call.1} parent=1 // loop_body
      %s22 = ssub.s32 %s17, 1
      %s23 = ssub.s32 %s17, 2
      %s30 = sadd.s32 1, %s25
      %p31 = scmp.ge.s32.totalorder %s30, 1
      %s32 = scalar_select %p31, 0, %s30
      %s33 = sadd.s32 1, %s24
      %s34 = scalar_select %p31, %s33, %s24
      %p35 = scmp.ge.s32.totalorder %s34, 2
      %s36 = scalar_select %p35, 0, %s34
      %s37 = sadd.s32 %s24, %s25
      %p38 = scmp.lt.s32.totalorder %s37, 0
      %s39 = scalar_select %p38, %s37, 0
      %s40 = sadd.s32 %s36, %s32
      %p41 = scmp.lt.s32.totalorder %s40, 0
      %s42 = scalar_select %p41, %s40, 0
      %s43 = ssub.s32 %s39, %s42
      %p44 = scmp.eq.s32.totalorder %s43, 0
      %s46 = sadd.s32 %s45, 1
      %s47 = scalar_select %p44, %s45, %s46
      %p50 = pneg %p44
      %p51 = scmp.eq.s32.totalorder %s17, 1
      %p52 = por %p50, %p51
      %p53 = scmp.ne.s32.totalorder %s45, %s48
      %p54 = scmp.eq.s32.totalorder %s17, 0
      %p55 = por %p53, %p54
      %p56 = scmp.ne.s32.totalorder %s45, %s48
      %p57 = scmp.eq.s32.totalorder %s22, 1
      %p58 = por %p56, %p57
      %p59 = scmp.ne.s32.totalorder %s48, %s49
      %p60 = scmp.eq.s32.totalorder %s22, 0
      %p61 = por %p59, %p60
      %p62 = scmp.ne.s32.totalorder %s48, %s49
      %p63 = scmp.eq.s32.totalorder %s23, 1
      %p64 = por %p62, %p63
      %p66 = scmp.ne.s32.totalorder %s49, %s65
      %p67 = scmp.eq.s32.totalorder %s23, 0
      %p68 = por %p66, %p67
      %s69 = sadd.s32 %s24, %s25
      %p70 = scmp.lt.s32.totalorder %s69, 0
      %s71 = scalar_select %p70, %s69, 0
      %s72 = sadd.s32 %s36, %s32
      %p73 = scmp.lt.s32.totalorder %s72, 0
      %s74 = scalar_select %p73, %s72, 0
      %s75 = ssub.s32 %s71, %s74
      %p76 = scmp.eq.s32.totalorder %s75, 0
      %s78 = sadd.s32 %s77, 1
      %s79 = scalar_select %p76, %s77, %s78
      %p82 = pneg %p76
      %p83 = scmp.eq.s32.totalorder %s17, 1
      %p84 = por %p82, %p83
      %p85 = scmp.ne.s32.totalorder %s77, %s80
      %p86 = scmp.eq.s32.totalorder %s17, 0
      %p87 = por %p85, %p86
      %p88 = scmp.ne.s32.totalorder %s77, %s80
      %p89 = scmp.eq.s32.totalorder %s22, 1
      %p90 = por %p88, %p89
      %p91 = scmp.ne.s32.totalorder %s80, %s81
      %p92 = scmp.eq.s32.totalorder %s22, 0
      %p93 = por %p91, %p92
      %p94 = scmp.ne.s32.totalorder %s80, %s81
      %p95 = scmp.eq.s32.totalorder %s23, 1
      %p96 = por %p94, %p95
      %p98 = scmp.ne.s32.totalorder %s81, %s97
      %p99 = scmp.eq.s32.totalorder %s23, 0
      %p100 = por %p98, %p99
      %s101 = ssub.s32 %s24, %s36
      %p102 = scmp.eq.s32.totalorder %s101, 0
      %s104 = sadd.s32 %s103, 1
      %s105 = scalar_select %p102, %s103, %s104
      %p108 = pneg %p102
      %p109 = scmp.eq.s32.totalorder %s17, 1
      %p110 = por %p108, %p109
      %p111 = scmp.ne.s32.totalorder %s103, %s106
      %p112 = scmp.eq.s32.totalorder %s17, 0
      %p113 = por %p111, %p112
      %p114 = scmp.ne.s32.totalorder %s103, %s106
      %p115 = scmp.eq.s32.totalorder %s22, 1
      %p116 = por %p114, %p115
      %p117 = scmp.ne.s32.totalorder %s106, %s107
      %p118 = scmp.eq.s32.totalorder %s22, 0
      %p119 = por %p117, %p118
      %p120 = scmp.ne.s32.totalorder %s106, %s107
      %p121 = scmp.eq.s32.totalorder %s23, 1
      %p122 = por %p120, %p121
      %p124 = scmp.ne.s32.totalorder %s107, %s123
      %p125 = scmp.eq.s32.totalorder %s23, 0
      %p126 = por %p124, %p125
      %p127 = scmp.le.s32.totalorder 1, %s17
      %p128 = scmp.lt.s32.totalorder %s17, 3
      %p129 = pnand %p127, %p128
      %p130 = pneg %p129
      // Predicated region
      $region9: #{tpu_custom_call.1} parent=5 // pred_check
        _
      $region10: #{tpu_custom_call.1} parent=5 // pred_check_branch
        %132 = sbr.rel (%p129) target = $region12
      $region11: #{tpu_custom_call.1} parent=5 // pred_region
        %s133 = ssub.s32 %s17, 1
      $region12: #{tpu_custom_call.1} parent=5 // pred_fallthru
        _
      %p134 = scmp.lt.s32.totalorder %s17, 2
      // Predicated region
      $region13: #{tpu_custom_call.1} parent=5 // pred_check
        %p135 = pneg %p134
      $region14: #{tpu_custom_call.1} parent=5 // pred_check_branch
        %137 = sbr.rel (%p135) target = $region16
      $region15: #{tpu_custom_call.1} parent=5 // pred_region
        // Predicated region
        $region17: #{tpu_custom_call.1} parent=15 // pred_check
          %p138 = pneg %p55
        $region18: #{tpu_custom_call.1} parent=15 // pred_check_branch
          %140 = sbr.rel (%p138) target = $region20
        $region19: #{tpu_custom_call.1} parent=15 // pred_region
          %s141 = sand.u32 %s45, 1
          %s142 = scalar_lea.sflag [#allocation3], %s141
          %s143 = sand.u32 %s45, 1
          %s144 = smul.addr %s143, 16
          %s145 = scalar_lea.vmem [#allocation2], %s144
          %s146 = sadd.s32 %s24, %s25
          %p147 = scmp.lt.s32.totalorder %s146, 0
          %s148 = scalar_select %p147, %s146, 0
          %s149 = smul.u32 2, %s148
          %s151 = ssub.s32 256, 256
          %152 = vsyncadd %s142, %s151
          %s153 = smul.addr %s149, 128
          %s154 = scalar_lea.hbm %s0, %s153
          %s155 = sshll.u32 %s145, 4
          %s156 = int_to_ptr.vmem [resolvable:$true] %s155
          %161 = dma.hbm_to_vmem [thread:$0]  %s154, 256, %s156, %s142, 128, 128, 8
        $region20: #{tpu_custom_call.1} parent=15 // pred_fallthru
          _
        // Predicated region
        $region21: #{tpu_custom_call.1} parent=15 // pred_check
          %p162 = pneg %p87
        $region22: #{tpu_custom_call.1} parent=15 // pred_check_branch
          %164 = sbr.rel (%p162) target = $region24
        $region23: #{tpu_custom_call.1} parent=15 // pred_region
          %s165 = sand.u32 %s77, 1
          %s166 = scalar_lea.sflag [#allocation6], %s165
          %s167 = sand.u32 %s77, 1
          %s168 = smul.addr %s167, 16
          %s169 = scalar_lea.vmem [#allocation5], %s168
          %s170 = sadd.s32 %s24, %s25
          %p171 = scmp.lt.s32.totalorder %s170, 0
          %s172 = scalar_select %p171, %s170, 0
          %s173 = smul.u32 2, %s172
          %s175 = ssub.s32 256, 256
          %176 = vsyncadd %s166, %s175
          %s177 = smul.addr %s173, 128
          %s178 = scalar_lea.hbm %s1, %s177
          %s179 = sshll.u32 %s169, 4
          %s180 = int_to_ptr.vmem [resolvable:$true] %s179
          %185 = dma.hbm_to_vmem [thread:$0]  %s178, 256, %s180, %s166, 128, 128, 8
        $region24: #{tpu_custom_call.1} parent=15 // pred_fallthru
          _
      $region16: #{tpu_custom_call.1} parent=5 // pred_fallthru
        _
      %p186 = scmp.le.s32.totalorder 1, %s17
      %p187 = scmp.lt.s32.totalorder %s17, 3
      %p188 = pnand %p186, %p187
      %p189 = pneg %p188
      // Predicated region
      $region25: #{tpu_custom_call.1} parent=5 // pred_check
        _
      $region26: #{tpu_custom_call.1} parent=5 // pred_check_branch
        %191 = sbr.rel (%p188) target = $region28
      $region27: #{tpu_custom_call.1} parent=5 // pred_region
        %s192 = ssub.s32 %s17, 1
        %s193 = sand.u32 %s48, 1
        %s194 = scalar_lea.sflag [#allocation3], %s193
        %s195 = sand.u32 %s48, 1
        %s196 = smul.addr %s195, 16
        %s197 = scalar_lea.vmem [#allocation2], %s196
        // Predicated region
        $region29: #{tpu_custom_call.1} parent=27 // pred_check
          %p198 = pneg %p61
        $region30: #{tpu_custom_call.1} parent=27 // pred_check_branch
          %200 = sbr.rel (%p198) target = $region32
        $region31: #{tpu_custom_call.1} parent=27 // pred_region
          %201 = dma.done %s194, 256
        $region32: #{tpu_custom_call.1} parent=27 // pred_fallthru
          _
        %s202 = sand.u32 %s80, 1
        %s203 = scalar_lea.sflag [#allocation6], %s202
        %s204 = sand.u32 %s80, 1
        %s205 = smul.addr %s204, 16
        %s206 = scalar_lea.vmem [#allocation5], %s205
        // Predicated region
        $region33: #{tpu_custom_call.1} parent=27 // pred_check
          %p207 = pneg %p93
        $region34: #{tpu_custom_call.1} parent=27 // pred_check_branch
          %209 = sbr.rel (%p207) target = $region36
        $region35: #{tpu_custom_call.1} parent=27 // pred_region
          %210 = dma.done %s203, 256
        $region36: #{tpu_custom_call.1} parent=27 // pred_fallthru
          _
        %s211 = sand.u32 %s48, 1
        %s212 = scalar_lea.sflag [#allocation3], %s211
        %s213 = sand.u32 %s48, 1
        %s214 = smul.addr %s213, 16
        %s215 = scalar_lea.vmem [#allocation2], %s214
        %p216 = pneg %p61
        %p217 = pneg %p58
        %s218 = sand.u32 %s80, 1
        %s219 = scalar_lea.sflag [#allocation6], %s218
        %s220 = sand.u32 %s80, 1
        %s221 = smul.addr %s220, 16
        %s222 = scalar_lea.vmem [#allocation5], %s221
        %p223 = pneg %p93
        %p224 = pneg %p90
        %p225 = pneg %p119
        %p226 = pneg %p116
        %s227 = sand.u32 %s106, 1
        %s228 = scalar_lea.sflag [#allocation4], %s227
        %s229 = sand.u32 %s106, 1
        %s230 = smul.addr %s229, 24
        %s231 = scalar_lea.vmem [#allocation7], %s230
        %s232 = sadd.s32 %s26, %s27
        %p233 = scmp.lt.s32.totalorder %s232, 0
        %s234 = scalar_select %p233, %s232, 0
        %s235 = smul.u32 2, %s234
        %s236 = sadd.s32 %s26, %s27
        %p237 = scmp.lt.s32.totalorder %s236, 0
        %s238 = scalar_select %p237, %s236, 0
        %s239 = smul.u32 2, %s238
        %p240 = scmp.eq.s32.totalorder %s27, 0
        // Predicated region
        $region37: #{tpu_custom_call.1} parent=27 // pred_check
          %p241 = pneg %p240
        $region38: #{tpu_custom_call.1} parent=27 // pred_check_branch
          %243 = sbr.rel (%p241) target = $region40
        $region39: #{tpu_custom_call.1} parent=27 // pred_region
          %244 = vst [vmem:[%s231] sm:$0xff] 0.0
          %245 = vst [vmem:[%s231 + $0x8] sm:$0xff] 0.0
          %246 = vst [vmem:[%s231 + $0x10] sm:$0xff] 0.0
        $region40: #{tpu_custom_call.1} parent=27 // pred_fallthru
          _
        %s247 = sadd.s32 %s26, %s27
        %s248 = smul.u32 %s247, 2048
        %v249 = vlaneseq
        %v250 = vshrl.u32 %v249, 7
        %v251 = vadd.s32 %v250, 8
        %v252 = vlaneseq
        %v253 = vand.u32 %v252, 127
        %v254 = vmul.u32 %v250, 128
        %v255 = vmul.u32 %v251, 128
        %v256 = vadd.s32 %v254, %v253
        %v257 = vadd.s32 %v255, %v253
        %s258 = ssub.s32 2048, %s248
        %v259 = vstv %s258
        %vm260 = vcmp.lt.s32.totalorder %v256, %v259
        %vm261 = vcmp.lt.s32.totalorder %v257, %v259
        %v262 = vld [vmem:[%s197] sm:$0xff]
        %v263 = vld [vmem:[%s197 + $0x8] sm:$0xff]
        %v264 = vld [vmem:[%s206] sm:$0xff]
        %v265 = vld [vmem:[%s206 + $0x8] sm:$0xff]
        %v266 = vsub.f32 0.0, %v262
        %v267 = vsub.f32 0.0, %v263
        %v268 = vmul.f32 %v266, 1.442695
        %v269 = vpow.pop %v268
        %v270 = vmul.f32 %v267, 1.442695
        %v271 = vpow.pop %v270
        %v272 = vadd.f32 %v269, 1.0
        %v273 = vadd.f32 %v271, 1.0
        %v274 = vrcp.pop %v272
        %v275 = vmul.f32 1.0, %v274
        %v276 = vrcp.pop %v273
        %v277 = vmul.f32 1.0, %v276
        %v278 = vsel %vm260, %v275, 0.0
        %v279 = vsel %vm261, %v277, 0.0
        %v280 = vsel %vm260, %v264, 0.0
        %v281 = vsel %vm261, %v265, 0.0
        %v282 = vmul.f32 %v280, %v278
        %v283 = vmul.f32 %v281, %v279
        %v284 = vadd.f32 %v282, %v283
        %v285 = vadd.f32 %v278, %v279
        %v286 = vadd.f32 %v280, %v281
        %v287 = vld [vmem:[%s231] sm:$0xff]
        %v288 = vadd.f32 %v287, %v284
        %289 = vst [vmem:[%s231] sm:$0xff] %v288
        %s290 = scalar_lea.vmem %s231, 8 [#allocation7]
        %v291 = vld [vmem:[%s290] sm:$0xff]
        %v292 = vadd.f32 %v291, %v285
        %293 = vst [vmem:[%s290] sm:$0xff] %v292
        %s294 = scalar_lea.vmem %s231, 16 [#allocation7]
        %v295 = vld [vmem:[%s294] sm:$0xff]
        %v296 = vadd.f32 %v295, %v286
        %297 = vst [vmem:[%s294] sm:$0xff] %v296
        %s298 = sand.u32 %s106, 1
        %s299 = scalar_lea.sflag [#allocation4], %s298
        %s300 = sand.u32 %s106, 1
        %s301 = smul.addr %s300, 24
        %s302 = scalar_lea.vmem [#allocation7], %s301
        // Predicated region
        $region41: #{tpu_custom_call.1} parent=27 // pred_check
          %p303 = pneg %p116
        $region42: #{tpu_custom_call.1} parent=27 // pred_check_branch
          %305 = sbr.rel (%p303) target = $region44
        $region43: #{tpu_custom_call.1} parent=27 // pred_region
          %s307 = ssub.s32 384, 384
          %308 = vsyncadd %s299, %s307
          %s309 = smul.addr %s26, 3
          %s310 = smul.addr %s309, 128
          %s311 = scalar_lea.hbm %s2, %s310
          %s312 = sshll.u32 %s302, 4
          %s313 = int_to_ptr.vmem [resolvable:$true] %s312
          %318 = dma.vmem_to_hbm [thread:$0]  %s313, 384, %s311, %s299, 128, 128, 8
        $region44: #{tpu_custom_call.1} parent=27 // pred_fallthru
          _
      $region28: #{tpu_custom_call.1} parent=5 // pred_fallthru
        _
      %p319 = scmp.le.s32.totalorder 2, %s17
      // Predicated region
      $region45: #{tpu_custom_call.1} parent=5 // pred_check
        %p320 = pneg %p319
      $region46: #{tpu_custom_call.1} parent=5 // pred_check_branch
        %322 = sbr.rel (%p320) target = $region48
      $region47: #{tpu_custom_call.1} parent=5 // pred_region
        %s323 = ssub.s32 %s17, 2
        // Predicated region
        $region49: #{tpu_custom_call.1} parent=47 // pred_check
          %p324 = pneg %p122
        $region50: #{tpu_custom_call.1} parent=47 // pred_check_branch
          %326 = sbr.rel (%p324) target = $region52
        $region51: #{tpu_custom_call.1} parent=47 // pred_region
          %s327 = sand.u32 %s107, 1
          %s328 = scalar_lea.sflag [#allocation4], %s327
          %s329 = sand.u32 %s107, 1
          %s330 = smul.addr %s329, 24
          %s331 = scalar_lea.vmem [#allocation7], %s330
          %332 = dma.done %s328, 384
        $region52: #{tpu_custom_call.1} parent=47 // pred_fallthru
          _
      $region48: #{tpu_custom_call.1} parent=5 // pred_fallthru
        _
    $region6: #{tpu_custom_call.1} parent=1 // loop_footer
      %s21 = sadd.s32 1, %s17
    $region7: #{tpu_custom_call.1} parent=1 // loop_footer_branch
      %16 = sbr.rel target = $region3
    $region8: #{tpu_custom_call.1} parent=1 // loop_exit
      _
    %333 = vsyncpa [#allocation3], 1
    %s334 = scalar_lea.sflag [#allocation3], 1
    %335 = vsyncpa %s334, 1
    %336 = vsyncpa [#allocation6], 1
    %s337 = scalar_lea.sflag [#allocation6], 1
    %338 = vsyncpa %s337, 1
    %339 = vsyncpa [#allocation4], 1
    %s340 = scalar_lea.sflag [#allocation4], 1
    %341 = vsyncpa %s340, 1

</llo_original>
